<compile_context>
chip_gen: v6e
topology: v6e:2x2x1
jax: 0.10.0
libtpu: 0.0.40
codegen_flags: <defaults>
</compile_context>

<pallas_src>
import functools

import jax
import jax.numpy as jnp
from jax import lax
from jax.experimental import pallas as pl
from jax.experimental.pallas import tpu as pltpu

EPS = 1e-10
_LANE = 128


def _topk_loss_kernel(pred_ref, ann_ref, out_ref):
    # pred_ref: (1, C, T) native dtype, ann_ref: (1, 1, T) int32,
    # out_ref:  (1, 1, T) float32 (label-channel log-prob only)
    x = pred_ref[...]                                    # native dtype
    labels = ann_ref[...]                                # (1, 1, T) int32

    # softmax normaliser over the channel (sublane) axis; widen only at exp
    m = jnp.max(x, axis=1, keepdims=True)                # (1, 1, T) native
    e = jnp.exp((x - m).astype(jnp.float32))             # (1, C, T) f32
    s = jnp.sum(e, axis=1, keepdims=True)                # (1, 1, T) f32

    # gather the label-channel logit on the NATIVE dtype (exactly one match
    # per pixel; labels assumed in [0, C) — same contract as torch scatter_)
    ch = lax.broadcasted_iota(jnp.int32, x.shape, 1)     # (1, C, T)
    x_label = jnp.sum(jnp.where(ch == labels, x, jnp.zeros_like(x)),
                      axis=1, keepdims=True)             # (1, 1, T) native
    e_label = jnp.exp((x_label - m).astype(jnp.float32))

    # exact parity with torch: log(softmax + eps); divide routed to the EUP
    p_label = e_label * pl.reciprocal(s, approx=False) + EPS
    out_ref[...] = jnp.log(p_label)


def _pick_tile_hw(hw, c, itemsize, batch):
    """Lane-aligned spatial tile sized from an explicit VMEM budget.

    Per-block working set ~ 2*C*T*itemsize (double-buffered pred) +
    ~2*C*T*4 B (f32 exp + onehot temporaries) + small (1,1,T) pieces.
    Keep it well under the smallest scoped-VMEM default (v5e: 16 MiB) while
    targeting >= ~1 MiB of pred bytes per block for DMA efficiency.
    """
    if hw <= _LANE:
        return hw                               # full extent (always legal)
    budget = 6 << 20
    per_px = c * (2 * itemsize + 2 * 4) + 16
    t_fit = budget // per_px
    t_dma = max((1 << 20) // max(c * itemsize, 1), _LANE)
    t = min(t_fit, 2 * t_dma, hw)
    t = max((t // _LANE) * _LANE, _LANE)
    # keep >= ~8 blocks so both v7x TensorCores and the pipeline stay busy
    while t > _LANE and batch * pl.cdiv(hw, t) < 8:
        t = max(((t // 2) // _LANE) * _LANE, _LANE)
    return t


def _sum_n_smallest(g, n):
    """Exact sum of the n smallest elements of 1-D f32 `g` (1 <= n <= len(g)),
    via a 33-step binary search on the monotone integer encoding of f32.
    O(len(g)) streaming work per step; no sort, no top_k."""
    u = lax.bitcast_convert_type(g, jnp.uint32)
    sign = jnp.uint32(0x80000000)
    key = jnp.where(u >= sign, ~u, u ^ sign)     # ascending key == ascending value

    def body(_, lohi):
        lo, hi = lohi
        mid = lo + (hi - lo) // jnp.uint32(2)
        cnt = jnp.sum((key <= mid).astype(jnp.int32))
        ge = cnt >= n
        return (jnp.where(ge, lo, mid + jnp.uint32(1)),
                jnp.where(ge, mid, hi))

    lo, _ = lax.fori_loop(0, 33, body,
                          (jnp.uint32(0), jnp.uint32(0xFFFFFFFF)))
    t_star = lo                                   # key of the n-th smallest value
    below = key < t_star
    cnt_lt = jnp.sum(below.astype(jnp.int32))
    sum_lt = jnp.sum(jnp.where(below, g, 0.0))
    v_t = jnp.max(jnp.where(key <= t_star, g, -jnp.inf))
    return sum_lt + (jnp.int32(n) - cnt_lt).astype(jnp.float32) * v_t


@functools.partial(jax.jit, static_argnames=("k",))
def topk_loss(pred, ann, k=10):
    """pred: (B, C, H, W) float (any dtype), ann: (B, H, W) integer labels."""
    B, C, H, W = pred.shape
    HW = H * W
    T = _pick_tile_hw(HW, C, pred.dtype.itemsize, B)

    pred3 = pred.reshape(B, C, HW)                # no wrapper-side dtype cast
    ann3 = jnp.asarray(ann, jnp.int32).reshape(B, 1, HW)

    label_logp = pl.pallas_call(
        _topk_loss_kernel,
        out_shape=jax.ShapeDtypeStruct((B, 1, HW), jnp.float32),
        grid_spec=pltpu.PrefetchScalarGridSpec(
            num_scalar_prefetch=0,
            grid=(B, pl.cdiv(HW, T)),             # tail block masked by Pallas
            in_specs=[
                pl.BlockSpec((1, C, T), lambda b, t: (b, 0, t)),
                pl.BlockSpec((1, 1, T), lambda b, t: (b, 0, t)),
            ],
            out_specs=pl.BlockSpec((1, 1, T), lambda b, t: (b, 0, t)),
        ),
        compiler_params=pltpu.CompilerParams(
            dimension_semantics=("parallel", "parallel")),
    )(pred3, ann3)
    # TODO(synk): for very small C a lane-dense 1-D (B*HW,) output layout would
    # trim ann/out DMA traffic further at the cost of an in-kernel relayout.

    # torch selects the n smallest of the dense (B*C*HW,) tensor, which is
    # {label log-probs} union {(C-1)*B*HW exact zeros}.  Zeros outrank any
    # negative label value, so the selected sum equals the sum of the n
    # smallest label values clamped from above at 0 (zeros fill the rest).
    g = jnp.minimum(label_logp.reshape(-1), 0.0)  # (B*HW,)
    m_count = B * HW
    total = B * C * HW
    n = max(int(total * k / 100), 1)

    if n >= m_count:
        selected_sum = jnp.sum(g)
    else:
        selected_sum = _sum_n_smallest(g, n)
    return (-1.0 / n) * selected_sum


def _reference_loss(pred, ann, k=10):
    """Pure-JAX mirror of the torch module (for a sanity check only)."""
    B, C, H, W = pred.shape
    p = jax.nn.softmax(pred.astype(jnp.float32), axis=1) + EPS
    onehot = jax.nn.one_hot(jnp.asarray(ann, jnp.int32), C, axis=1,
                            dtype=jnp.float32)
    loss = (onehot * jnp.log(p)).reshape(-1)
    n = max(int(loss.shape[0] * k / 100), 1)
    vals = -lax.top_k(-loss, n)[0]
    return (-1.0 / n) * jnp.sum(vals)


if __name__ == "__main__":
    key = jax.random.PRNGKey(0)
    kp, ka = jax.random.split(key)

    B, C, H, W = 2, 4, 16, 16
    pred = jax.random.normal(kp, (B, C, H, W), dtype=jnp.float32)
    ann = jax.random.randint(ka, (B, H, W), 0, C, dtype=jnp.int32)

    loss = topk_loss(pred, ann, k=10)
    loss = jax.block_until_ready(loss)
    assert jnp.isfinite(loss)

    ref = jax.block_until_ready(_reference_loss(pred, ann, k=10))
    assert jnp.abs(loss - ref) < 1e-4 * (1.0 + jnp.abs(ref)), (loss, ref)

    print("KERNEL_OK")
</pallas_src>

<mosaic_0001>
module attributes {stable_mosaic.version = 11 : i64} {
  func.func @_topk_loss_kernel(%arg0: i32, %arg1: i32, %arg2: memref<1x4x128xf32, #tpu.memory_space<vmem>>, %arg3: memref<1x1x128xi32, #tpu.memory_space<vmem>>, %arg4: memref<1x1x128xf32, #tpu.memory_space<vmem>>) attributes {dimension_semantics = [#tpu.dimension_semantics<parallel>, #tpu.dimension_semantics<parallel>], iteration_bounds = array<i64: 2, 2>, scalar_prefetch = 0 : i64, scratch_operands = 0 : i64, tpu.core_type = #tpu.core_type<tc>, window_params = [{transform_indices = @transform_0, window_bounds = array<i64: 1, 4, 128>}, {transform_indices = @transform_1, window_bounds = array<i64: 1, 1, 128>}, {transform_indices = @transform_2, window_bounds = array<i64: 1, 1, 128>}]} {
    %c0 = arith.constant 0 : index
    %c0_0 = arith.constant 0 : index
    %c0_1 = arith.constant 0 : index
    %0 = vector.load %arg2[%c0, %c0_0, %c0_1] : memref<1x4x128xf32, #tpu.memory_space<vmem>>, vector<1x4x128xf32>
    %c0_2 = arith.constant 0 : index
    %c0_3 = arith.constant 0 : index
    %c0_4 = arith.constant 0 : index
    %1 = vector.load %arg3[%c0_2, %c0_3, %c0_4] : memref<1x1x128xi32, #tpu.memory_space<vmem>>, vector<1x1x128xi32>
    %cst = arith.constant dense<0xFF800000> : vector<1x128xf32>
    %2 = vector.multi_reduction <maximumf>, %0, %cst [1] : vector<1x4x128xf32> to vector<1x128xf32>
    %3 = vector.shape_cast %2 : vector<1x128xf32> to vector<1x1x128xf32>
    %4 = vector.broadcast %3 : vector<1x1x128xf32> to vector<1x4x128xf32>
    %5 = arith.subf %0, %4 : vector<1x4x128xf32>
    %6 = math.exp %5 : vector<1x4x128xf32>
    %cst_5 = arith.constant dense<0.000000e+00> : vector<1x128xf32>
    %7 = vector.multi_reduction <add>, %6, %cst_5 [1] : vector<1x4x128xf32> to vector<1x128xf32>
    %8 = vector.shape_cast %7 : vector<1x128xf32> to vector<1x1x128xf32>
    %9 = tpu.iota {dimensions = array<i32: 1>} : vector<1x4x128xi32>
    %10 = vector.broadcast %1 : vector<1x1x128xi32> to vector<1x4x128xi32>
    %11 = arith.cmpi eq, %9, %10 : vector<1x4x128xi32>
    %cst_6 = arith.constant 0.000000e+00 : f32
    %12 = vector.broadcast %cst_6 : f32 to vector<1x4x128xf32>
    %13 = arith.select %11, %0, %12 : vector<1x4x128xi1>, vector<1x4x128xf32>
    %cst_7 = arith.constant dense<0.000000e+00> : vector<1x128xf32>
    %14 = vector.multi_reduction <add>, %13, %cst_7 [1] : vector<1x4x128xf32> to vector<1x128xf32>
    %15 = vector.shape_cast %14 : vector<1x128xf32> to vector<1x1x128xf32>
    %16 = arith.subf %15, %3 : vector<1x1x128xf32>
    %17 = math.exp %16 : vector<1x1x128xf32>
    %18 = tpu.reciprocal %8 : vector<1x1x128xf32> -> vector<1x1x128xf32>
    %19 = arith.mulf %17, %18 : vector<1x1x128xf32>
    %cst_8 = arith.constant 1.000000e-10 : f32
    %20 = vector.broadcast %cst_8 : f32 to vector<1x1x128xf32>
    %21 = arith.addf %19, %20 : vector<1x1x128xf32>
    %22 = math.log %21 : vector<1x1x128xf32>
    %c0_9 = arith.constant 0 : index
    %c0_10 = arith.constant 0 : index
    %c0_11 = arith.constant 0 : index
    %23 = vector.load %arg4[%c0_9, %c0_10, %c0_11] : memref<1x1x128xf32, #tpu.memory_space<vmem>>, vector<1x1x128xf32>
    tpu.vector_store %arg4[%c0_9, %c0_10, %c0_11], %22 {strides = array<i32>} : memref<1x1x128xf32, #tpu.memory_space<vmem>>, vector<1x1x128xf32>,
    return
  }
  func.func @transform_0(%arg0: i32, %arg1: i32) -> (i32, i32, i32) {
    %c0_i32 = arith.constant 0 : i32
    %c0_i32_0 = arith.constant 0 : i32
    return %arg0, %c0_i32, %arg1 : i32, i32, i32
  }
  func.func @transform_1(%arg0: i32, %arg1: i32) -> (i32, i32, i32) {
    %c0_i32 = arith.constant 0 : i32
    %c0_i32_0 = arith.constant 0 : i32
    return %arg0, %c0_i32, %arg1 : i32, i32, i32
  }
  func.func @transform_2(%arg0: i32, %arg1: i32) -> (i32, i32, i32) {
    %c0_i32 = arith.constant 0 : i32
    %c0_i32_0 = arith.constant 0 : i32
    return %arg0, %c0_i32, %arg1 : i32, i32, i32
  }
}

</mosaic_0001>

<llo_original>
// kernel: topk_loss.1
$region0: #{topk_loss.1}
  #allocation0 [shape = 'u32[]', space=smem, size = 0x4, offset = 0x4, fixed_abs, tag = 'smem constant byte address 0x4 - core index']
  #allocation1 [shape = 'u32[144,128]{1,0:T(1,128)}', space=vmem, size = 0x12000, scoped, tag = 'internal scratch']
  %s0 = inlined_call_operand.vmem [shape: f32[2,4,256], index: 0, kind: input, shape index: {}]
  %s1 = inlined_call_operand.vmem [shape: s32[2,1,256], index: 1, kind: input, shape index: {}]
  %s2 = inlined_call_operand.vmem [shape: f32[2,1,256], index: 2, kind: output, shape index: {}]
  %s3 = sld [smem:[#allocation0]]
  $region41: #{topk_loss.1} parent=0
    _
  %s5 = ssub.s32 1, %s3
  %s6 = scalar_select 0, %s5, %s3
  loop: start=0, step=1, limit=6
  $region2: #{topk_loss.1} parent=0 // loop_pre_header
    _
  $region3: #{topk_loss.1} parent=0 // loop_header
    %s8 = sphi 0, %s12
    %p9 = scmp.ge.s32.totalorder %s8, 6
    %s15 = sphi 0, %s27
    %s16 = sphi 0, %s23
    %s17 = sphi 0, %s15
    %s18 = sphi 0, %s16
    %s19 = sphi 0, %s17
    %s20 = sphi 0, %s18
    %s32 = sphi 0, %s34
    %s35 = sphi 0, %s32
    %s36 = sphi 0, %s35
    %s52 = sphi 0, %s36
    %s60 = sphi 0, %s62
    %s63 = sphi 0, %s60
    %s64 = sphi 0, %s63
    %s80 = sphi 0, %s64
    %s88 = sphi 0, %s90
    %s91 = sphi 0, %s88
    %s92 = sphi 0, %s91
    %s108 = sphi 0, %s92
  $region4: #{topk_loss.1} parent=0 // loop_header_branch
    %11 = sbr.rel (%p9) target = $region8
  $region5: #{topk_loss.1} parent=0 // loop_body
    %s13 = ssub.s32 %s8, 1
    %s14 = ssub.s32 %s8, 2
    %s21 = sadd.s32 1, %s16
    %p22 = scmp.ge.s32.totalorder %s21, 2
    %s23 = scalar_select %p22, 0, %s21
    %s24 = sadd.s32 1, %s15
    %s25 = scalar_select %p22, %s24, %s15
    %p26 = scmp.ge.s32.totalorder %s25, 2
    %s27 = scalar_select %p26, 0, %s25
    %s28 = ssub.s32 %s15, %s27
    %s29 = ssub.s32 %s16, %s23
    %s30 = sor.u32 %s28, %s29
    %p31 = scmp.eq.s32.totalorder %s30, 0
    %s33 = sadd.s32 %s32, 1
    %s34 = scalar_select %p31, %s32, %s33
    %p37 = pneg %p31
    %p38 = scmp.eq.s32.totalorder %s8, 3
    %p39 = por %p37, %p38
    %p40 = scmp.ne.s32.totalorder %s32, %s35
    %p41 = scmp.eq.s32.totalorder %s8, 0
    %p42 = por %p40, %p41
    %p43 = scmp.ne.s32.totalorder %s32, %s35
    %p44 = scmp.eq.s32.totalorder %s13, 3
    %p45 = por %p43, %p44
    %p46 = scmp.ne.s32.totalorder %s35, %s36
    %p47 = scmp.eq.s32.totalorder %s13, 0
    %p48 = por %p46, %p47
    %p49 = scmp.ne.s32.totalorder %s35, %s36
    %p50 = scmp.eq.s32.totalorder %s14, 3
    %p51 = por %p49, %p50
    %p53 = scmp.ne.s32.totalorder %s36, %s52
    %p54 = scmp.eq.s32.totalorder %s14, 0
    %p55 = por %p53, %p54
    %s56 = ssub.s32 %s15, %s27
    %s57 = ssub.s32 %s16, %s23
    %s58 = sor.u32 %s56, %s57
    %p59 = scmp.eq.s32.totalorder %s58, 0
    %s61 = sadd.s32 %s60, 1
    %s62 = scalar_select %p59, %s60, %s61
    %p65 = pneg %p59
    %p66 = scmp.eq.s32.totalorder %s8, 3
    %p67 = por %p65, %p66
    %p68 = scmp.ne.s32.totalorder %s60, %s63
    %p69 = scmp.eq.s32.totalorder %s8, 0
    %p70 = por %p68, %p69
    %p71 = scmp.ne.s32.totalorder %s60, %s63
    %p72 = scmp.eq.s32.totalorder %s13, 3
    %p73 = por %p71, %p72
    %p74 = scmp.ne.s32.totalorder %s63, %s64
    %p75 = scmp.eq.s32.totalorder %s13, 0
    %p76 = por %p74, %p75
    %p77 = scmp.ne.s32.totalorder %s63, %s64
    %p78 = scmp.eq.s32.totalorder %s14, 3
    %p79 = por %p77, %p78
    %p81 = scmp.ne.s32.totalorder %s64, %s80
    %p82 = scmp.eq.s32.totalorder %s14, 0
    %p83 = por %p81, %p82
    %s84 = ssub.s32 %s15, %s27
    %s85 = ssub.s32 %s16, %s23
    %s86 = sor.u32 %s84, %s85
    %p87 = scmp.eq.s32.totalorder %s86, 0
    %s89 = sadd.s32 %s88, 1
    %s90 = scalar_select %p87, %s88, %s89
    %p93 = pneg %p87
    %p94 = scmp.eq.s32.totalorder %s8, 3
    %p95 = por %p93, %p94
    %p96 = scmp.ne.s32.totalorder %s88, %s91
    %p97 = scmp.eq.s32.totalorder %s8, 0
    %p98 = por %p96, %p97
    %p99 = scmp.ne.s32.totalorder %s88, %s91
    %p100 = scmp.eq.s32.totalorder %s13, 3
    %p101 = por %p99, %p100
    %p102 = scmp.ne.s32.totalorder %s91, %s92
    %p103 = scmp.eq.s32.totalorder %s13, 0
    %p104 = por %p102, %p103
    %p105 = scmp.ne.s32.totalorder %s91, %s92
    %p106 = scmp.eq.s32.totalorder %s14, 3
    %p107 = por %p105, %p106
    %p109 = scmp.ne.s32.totalorder %s92, %s108
    %p110 = scmp.eq.s32.totalorder %s14, 0
    %p111 = por %p109, %p110
    %p112 = scmp.le.s32.totalorder 1, %s8
    %p113 = scmp.lt.s32.totalorder %s8, 5
    %p114 = pnand %p112, %p113
    %p115 = pneg %p114
    // Predicated region
    $region9: #{topk_loss.1} parent=5 // pred_check
      _
    $region10: #{topk_loss.1} parent=5 // pred_check_branch
      %117 = sbr.rel (%p114) target = $region12
    $region11: #{topk_loss.1} parent=5 // pred_region
      %s118 = ssub.s32 %s8, 1
    $region12: #{topk_loss.1} parent=5 // pred_fallthru
      _
    %p119 = scmp.lt.s32.totalorder %s8, 4
    // Predicated region
    $region13: #{topk_loss.1} parent=5 // pred_check
      %p120 = pneg %p119
    $region14: #{topk_loss.1} parent=5 // pred_check_branch
      %122 = sbr.rel (%p120) target = $region16
    $region15: #{topk_loss.1} parent=5 // pred_region
      // Predicated region
      $region17: #{topk_loss.1} parent=15 // pred_check
        %p123 = pneg %p42
      $region18: #{topk_loss.1} parent=15 // pred_check_branch
        %125 = sbr.rel (%p123) target = $region20
      $region19: #{topk_loss.1} parent=15 // pred_region
        %p126 = scmp.lt.s32.totalorder %s15, 1
        %s127 = scalar_select %p126, %s15, 1
        %p128 = scmp.lt.s32.totalorder %s16, 1
        %s129 = scalar_select %p128, %s16, 1
        %s130 = smul.addr %s127, 2
        %s131 = sadd.s32 %s129, %s130
        %s132 = smul.addr %s131, 4
        %s133 = scalar_lea.vmem %s0, %s132
      $region20: #{topk_loss.1} parent=15 // pred_fallthru
        _
      // Predicated region
      $region21: #{topk_loss.1} parent=15 // pred_check
        %p134 = pneg %p70
      $region22: #{topk_loss.1} parent=15 // pred_check_branch
        %136 = sbr.rel (%p134) target = $region24
      $region23: #{topk_loss.1} parent=15 // pred_region
        %p137 = scmp.lt.s32.totalorder %s15, 1
        %s138 = scalar_select %p137, %s15, 1
        %p139 = scmp.lt.s32.totalorder %s16, 1
        %s140 = scalar_select %p139, %s16, 1
        %s141 = smul.addr %s138, 2
        %s142 = sadd.s32 %s140, %s141
        %s143 = scalar_lea.vmem %s1, %s142
      $region24: #{topk_loss.1} parent=15 // pred_fallthru
        _
    $region16: #{topk_loss.1} parent=5 // pred_fallthru
      _
    %p144 = scmp.le.s32.totalorder 1, %s8
    %p145 = scmp.lt.s32.totalorder %s8, 5
    %p146 = pnand %p144, %p145
    %p147 = pneg %p146
    // Predicated region
    $region25: #{topk_loss.1} parent=5 // pred_check
      _
    $region26: #{topk_loss.1} parent=5 // pred_check_branch
      %149 = sbr.rel (%p146) target = $region28
    $region27: #{topk_loss.1} parent=5 // pred_region
      %s150 = ssub.s32 %s8, 1
      %p151 = scmp.lt.s32.totalorder %s17, 1
      %s152 = scalar_select %p151, %s17, 1
      %p153 = scmp.lt.s32.totalorder %s18, 1
      %s154 = scalar_select %p153, %s18, 1
      %s155 = smul.addr %s152, 2
      %s156 = sadd.s32 %s154, %s155
      %s157 = smul.addr %s156, 4
      %s158 = scalar_lea.vmem %s0, %s157
      %p159 = pneg %p48
      %p160 = pneg %p45
      %p161 = scmp.lt.s32.totalorder %s17, 1
      %s162 = scalar_select %p161, %s17, 1
      %p163 = scmp.lt.s32.totalorder %s18, 1
      %s164 = scalar_select %p163, %s18, 1
      %s165 = smul.addr %s162, 2
      %s166 = sadd.s32 %s164, %s165
      %s167 = scalar_lea.vmem %s1, %s166
      %p168 = pneg %p76
      %p169 = pneg %p73
      %p170 = pneg %p104
      %p171 = pneg %p101
      %p172 = scmp.lt.s32.totalorder %s17, 1
      %s173 = scalar_select %p172, %s17, 1
      %p174 = scmp.lt.s32.totalorder %s18, 1
      %s175 = scalar_select %p174, %s18, 1
      %s176 = smul.addr %s173, 2
      %s177 = sadd.s32 %s175, %s176
      %s178 = scalar_lea.vmem %s2, %s177
      %p179 = scmp.lt.s32.totalorder %s17, 1
      %s180 = scalar_select %p179, %s17, 1
      %p181 = scmp.lt.s32.totalorder %s18, 1
      %s182 = scalar_select %p181, %s18, 1
      %s183 = smul.addr %s180, 2
      %s184 = sadd.s32 %s182, %s183
      %s185 = smul.addr %s184, 4
      %s186 = scalar_lea.vmem %s0, %s185
      %p187 = scmp.lt.s32.totalorder %s17, 1
      %s188 = scalar_select %p187, %s17, 1
      %p189 = scmp.lt.s32.totalorder %s18, 1
      %s190 = scalar_select %p189, %s18, 1
      %s191 = smul.addr %s188, 2
      %s192 = sadd.s32 %s190, %s191
      %s193 = scalar_lea.vmem %s1, %s192
      %p194 = scmp.lt.s32.totalorder %s17, 1
      %s195 = scalar_select %p194, %s17, 1
      %p196 = scmp.lt.s32.totalorder %s18, 1
      %s197 = scalar_select %p196, %s18, 1
      %s198 = smul.addr %s195, 2
      %s199 = sadd.s32 %s197, %s198
      %s200 = scalar_lea.vmem %s2, %s199
      %v201 = vld [vmem:[%s186] sm:$0xf]
      %v202 = vld [vmem:[%s193] sm:$0x1]
      %vm203 = vcmask 1043456
      %v204 = vsel %vm203, %v201, -inf
      %v205 = vrot.slane %v204, 4
      %v206 = vmax.f32 %v204, %v205
      %v207 = vrot.slane %v206, 2
      %v208 = vmax.f32 %v206, %v207
      %v209 = vrot.slane %v208, 1
      %v210 = vmax.f32 %v208, %v209
      %v211 = vsub.f32 %v201, %v210
      %v212 = vmul.f32 %v211, 1.442695
      %v213 = vpow.pop %v212
      %v214 = vsel %vm203, %v213, 0.0
      %v215 = vrot.slane %v214, 4
      %v216 = vadd.f32 %v214, %v215
      %v217 = vrot.slane %v216, 2
      %v218 = vadd.f32 %v216, %v217
      %v219 = vrot.slane %v218, 1
      %v220 = vadd.f32 %v218, %v219
      %v221 = vlaneseq
      %v222 = vshrl.u32 %v221, 7
      %v223 = vlaneseq
      %v224 = vshrl.u32 %v223, 7
      %v225 = vsub.s32 0, %v224
      %v226 = vrot.slane %v202, %v225
      %vm227 = vcmp.eq.s32.totalorder %v222, %v226
      %v228 = vsel %vm227, %v201, 0.0
      %v229 = vsel %vm203, %v228, 0.0
      %v230 = vrot.slane %v229, 4
      %v231 = vadd.f32 %v229, %v230
      %v232 = vrot.slane %v231, 2
      %v233 = vadd.f32 %v231, %v232
      %v234 = vrot.slane %v233, 1
      %v235 = vadd.f32 %v233, %v234
      %v236 = vsub.f32 %v235, %v210
      %v237 = vmul.f32 %v236, 1.442695
      %v238 = vpow.pop %v237
      %v239 = vrcp.pop %v220
      %v240 = vmul.f32 %v238, %v239
      %v241 = vadd.f32 %v240, 1e-10
      %v242 = vlog2.pop %v241
      %v243 = vmul.f32 %v242, 0.6931472
      %244 = vst [vmem:[%s200] sm:$0x1] %v243
      %p245 = scmp.lt.s32.totalorder %s17, 1
      %s246 = scalar_select %p245, %s17, 1
      %p247 = scmp.lt.s32.totalorder %s18, 1
      %s248 = scalar_select %p247, %s18, 1
      %s249 = smul.addr %s246, 2
      %s250 = sadd.s32 %s248, %s249
      %s251 = scalar_lea.vmem %s2, %s250
      // Predicated region
      $region29: #{topk_loss.1} parent=27 // pred_check
        %p252 = pneg %p101
      $region30: #{topk_loss.1} parent=27 // pred_check_branch
        %254 = sbr.rel (%p252) target = $region32
      $region31: #{topk_loss.1} parent=27 // pred_region
        _
      $region32: #{topk_loss.1} parent=27 // pred_fallthru
        _
    $region28: #{topk_loss.1} parent=5 // pred_fallthru
      _
    %p255 = scmp.le.s32.totalorder 2, %s8
    // Predicated region
    $region33: #{topk_loss.1} parent=5 // pred_check
      %p256 = pneg %p255
    $region34: #{topk_loss.1} parent=5 // pred_check_branch
      %258 = sbr.rel (%p256) target = $region36
    $region35: #{topk_loss.1} parent=5 // pred_region
      %s259 = ssub.s32 %s8, 2
      // Predicated region
      $region37: #{topk_loss.1} parent=35 // pred_check
        %p260 = pneg %p107
      $region38: #{topk_loss.1} parent=35 // pred_check_branch
        %262 = sbr.rel (%p260) target = $region40
      $region39: #{topk_loss.1} parent=35 // pred_region
        %p263 = scmp.lt.s32.totalorder %s19, 1
        %s264 = scalar_select %p263, %s19, 1
        %p265 = scmp.lt.s32.totalorder %s20, 1
        %s266 = scalar_select %p265, %s20, 1
        %s267 = smul.addr %s264, 2
        %s268 = sadd.s32 %s266, %s267
        %s269 = scalar_lea.vmem %s2, %s268
      $region40: #{topk_loss.1} parent=35 // pred_fallthru
        _
    $region36: #{topk_loss.1} parent=5 // pred_fallthru
      _
  $region6: #{topk_loss.1} parent=0 // loop_footer
    %s12 = sadd.s32 1, %s8
  $region7: #{topk_loss.1} parent=0 // loop_footer_branch
    %7 = sbr.rel target = $region3
  $region8: #{topk_loss.1} parent=0 // loop_exit
    _

</llo_original>
